<compile_context>
chip_gen: v7x
topology: tpu7x:2x2x1
jax: 0.10.0
libtpu: 0.0.40
codegen_flags: <defaults>
</compile_context>

<pallas_src>
import functools

import jax
import jax.numpy as jnp
from jax.experimental import pallas as pl
from jax.experimental.pallas import tpu as pltpu

_LANES = 128
_MAX_BLOCK_ROWS = 2048    # (2048,128) f32 = 1 MiB per buffer
_MIN_KERNEL_ELEMS = 1024  # below this, launch/pad overhead dominates -> jnp


def _round_up(a, m):
    return ((a + m - 1) // m) * m


def _net1_kernel(hidden, p_ref, x_ref, o_ref):
    """p_ref: (3*H + 1,) f32 in SMEM holding PRE-PERTURBED parameters:
         [0:H)    w1' = w1 + nw1*std
         [H:2H)   b1' = b1 + nb1*std
         [2H:3H)  w2' = w2 + nw2*std
         [3H]     b2' = b2 + nb2*std   (scalar)
    x_ref / o_ref: (TR, 128) f32 lane-dense batch tiles.
    """
    x = x_ref[...]                                   # (TR, 128)

    # Perturbed output bias seeds the accumulator (saves one full-tile add).
    acc0 = jnp.full_like(x, p_ref[3 * hidden])
    acc1 = jnp.zeros_like(x)

    # Unrolled loop over the H hidden units; per-unit params are SMEM scalars
    # broadcast over the lane-dense tile (VPU mul/add + EUP tanh). Two partial
    # accumulators keep more EUP pushes in flight per tile.
    for j in range(hidden):
        t = p_ref[2 * hidden + j] * jnp.tanh(x * p_ref[j] + p_ref[hidden + j])
        if j % 2 == 0:
            acc0 = acc0 + t
        else:
            acc1 = acc1 + t

    o_ref[...] = (acc0 + acc1).astype(o_ref.dtype)


def net1_forward(x, params, noise, noise_std=0.5):
    """x: (..., 1). params/noise: (W1 (H,1), b1 (H,), W2 (1,H), b2 (1,))."""
    w1, b1, w2, b2 = params
    nw1, nb1, nw2, nb2 = noise
    h = w1.shape[0]
    assert w1.shape == (h, 1) and b1.shape == (h,)
    assert w2.shape == (1, h) and b2.shape == (1,)
    assert nw1.shape == w1.shape and nb1.shape == b1.shape
    assert nw2.shape == w2.shape and nb2.shape == b2.shape

    std = jnp.float32(noise_std)
    # Perturb once in the wrapper (removes per-grid-step scalar FMAs in-kernel).
    w1p = (w1 + nw1 * std).reshape(-1).astype(jnp.float32)   # (H,)
    b1p = (b1 + nb1 * std).reshape(-1).astype(jnp.float32)   # (H,)
    w2p = (w2 + nw2 * std).reshape(-1).astype(jnp.float32)   # (H,)
    b2p = (b2 + nb2 * std).reshape(-1).astype(jnp.float32)   # (1,)

    orig_shape = x.shape
    orig_dtype = x.dtype
    xf = x.reshape(-1).astype(jnp.float32)
    n = xf.shape[0]

    # Tiny-batch fallback: the whole problem is ~1 vreg.
    if n < _MIN_KERNEL_ELEMS:
        hid = jnp.tanh(xf[:, None] * w1p[None, :] + b1p[None, :])
        y = hid @ w2p[:, None] + b2p
        return y.reshape(orig_shape).astype(orig_dtype)

    # Lane-dense layout: flat batch -> (rows, 128) f32 tiles.
    r = -(-n // _LANES)                              # ceil(n / 128)
    if r <= _MAX_BLOCK_ROWS:
        if r >= 16:
            # Guarantee >= 2 blocks so both v7x TensorCores get work
            # (one extra ~0.35us grid step on 1-TC chips — negligible).
            tr = _round_up(-(-r // 2), 8)
            r_pad = 2 * tr
        else:
            tr = _round_up(r, 8)
            r_pad = tr
    else:
        tr = _MAX_BLOCK_ROWS
        r_pad = _round_up(r, tr)

    pad = r_pad * _LANES - n
    # Tail-only pad (no full-size scatter); skip entirely when aligned.
    xp = (xf if pad == 0 else jnp.pad(xf, (0, pad))).reshape(r_pad, _LANES)

    # Single tiny 1-D SMEM-resident parameter vector (avoids 2-D SMEM padding).
    pvec = jnp.concatenate([w1p, b1p, w2p, b2p])     # (3H + 1,)

    out = pl.pallas_call(
        functools.partial(_net1_kernel, h),
        out_shape=jax.ShapeDtypeStruct((r_pad, _LANES), jnp.float32),
        grid=(r_pad // tr,),
        in_specs=[
            # Packed params: whole array, resident in SMEM across the grid.
            pl.BlockSpec(memory_space=pltpu.MemorySpace.SMEM),
            # Lane-dense batch tiles.
            pl.BlockSpec((tr, _LANES), lambda i: (i, 0)),
        ],
        out_specs=pl.BlockSpec((tr, _LANES), lambda i: (i, 0)),
        compiler_params=pltpu.CompilerParams(
            dimension_semantics=("parallel",)),      # megacore sharding on v7x
    )(pvec, xp)

    y = out.reshape(-1)
    if pad != 0:
        y = y[:n]
    return y.reshape(orig_shape).astype(orig_dtype)


def _reference(x, params, noise, noise_std=0.5):
    w1, b1, w2, b2 = params
    nw1, nb1, nw2, nb2 = noise
    nw1_ = w1 + nw1 * noise_std
    nb1_ = b1 + nb1 * noise_std
    nw2_ = w2 + nw2 * noise_std
    nb2_ = b2 + nb2 * noise_std
    h = jnp.tanh(x @ nw1_.T + nb1_)
    return h @ nw2_.T + nb2_


if __name__ == "__main__":
    key = jax.random.PRNGKey(0)
    ks = jax.random.split(key, 9)
    H = 10   # hidden units, as in nn.Linear(1, 10)

    # Deterministic "checkpoint": PyTorch-like parameter shapes.
    w1 = jax.random.normal(ks[0], (H, 1), jnp.float32) * 0.5   # Linear(1,10).weight
    b1 = jax.random.normal(ks[1], (H,), jnp.float32) * 0.1     # Linear(1,10).bias
    w2 = jax.random.normal(ks[2], (1, H), jnp.float32) * 0.5   # Linear(10,1).weight
    b2 = jax.random.normal(ks[3], (1,), jnp.float32) * 0.1     # Linear(10,1).bias

    # Deterministic draws standing in for torch.randn_like(...) in forward.
    nw1 = jax.random.normal(ks[4], (H, 1), jnp.float32)
    nb1 = jax.random.normal(ks[5], (H,), jnp.float32)
    nw2 = jax.random.normal(ks[6], (1, H), jnp.float32)
    nb2 = jax.random.normal(ks[7], (1,), jnp.float32)

    params = (w1, b1, w2, b2)
    noise = (nw1, nb1, nw2, nb2)

    kx = jax.random.split(ks[8], 3)
    # (N=8: tiny-batch fallback; N=4096: aligned kernel path, 2-block grid;
    #  N=5000: kernel path with tail padding / output slice.)
    for kk, n_batch in zip(kx, (8, 4096, 5000)):
        x = jax.random.normal(kk, (n_batch, 1), jnp.float32)
        y = net1_forward(x, params, noise, noise_std=0.5)
        jax.block_until_ready(y)
        y_ref = _reference(x, params, noise, noise_std=0.5)
        assert y.shape == (n_batch, 1)
        assert jnp.allclose(y, y_ref, atol=1e-5, rtol=1e-5)

    print("KERNEL_OK")
</pallas_src>

<mosaic_0001>
module attributes {stable_mosaic.version = 11 : i64} {
  func.func @_net1_kernel(%arg0: i32, %arg1: memref<31xf32, #tpu.memory_space<smem>>, %arg2: memref<16x128xf32, #tpu.memory_space<vmem>>, %arg3: memref<16x128xf32, #tpu.memory_space<vmem>>) attributes {dimension_semantics = [#tpu.dimension_semantics<parallel>], iteration_bounds = array<i64: 2>, scalar_prefetch = 0 : i64, scratch_operands = 0 : i64, tpu.core_type = #tpu.core_type<tc>, window_params = [{transform_indices = @transform_0, window_bounds = array<i64: 31>}, {transform_indices = @transform_1, window_bounds = array<i64: 16, 128>}, {transform_indices = @transform_2, window_bounds = array<i64: 16, 128>}]} {
    %c0 = arith.constant 0 : index
    %c0_0 = arith.constant 0 : index
    %0 = vector.load %arg2[%c0, %c0_0] : memref<16x128xf32, #tpu.memory_space<vmem>>, vector<16x128xf32>
    %c30 = arith.constant 30 : index
    %1 = memref.load %arg1[%c30] : memref<31xf32, #tpu.memory_space<smem>>
    %2 = vector.broadcast %1 : f32 to vector<16x128xf32>
    %cst = arith.constant 0.000000e+00 : f32
    %3 = vector.broadcast %cst : f32 to vector<16x128xf32>
    %c20 = arith.constant 20 : index
    %4 = memref.load %arg1[%c20] : memref<31xf32, #tpu.memory_space<smem>>
    %c0_1 = arith.constant 0 : index
    %5 = memref.load %arg1[%c0_1] : memref<31xf32, #tpu.memory_space<smem>>
    %6 = vector.broadcast %5 : f32 to vector<16x128xf32>
    %7 = arith.mulf %0, %6 : vector<16x128xf32>
    %c10 = arith.constant 10 : index
    %8 = memref.load %arg1[%c10] : memref<31xf32, #tpu.memory_space<smem>>
    %9 = vector.broadcast %8 : f32 to vector<16x128xf32>
    %10 = arith.addf %7, %9 : vector<16x128xf32>
    %11 = math.tanh %10 : vector<16x128xf32>
    %12 = vector.broadcast %4 : f32 to vector<16x128xf32>
    %13 = arith.mulf %12, %11 : vector<16x128xf32>
    %14 = arith.addf %2, %13 : vector<16x128xf32>
    %c21 = arith.constant 21 : index
    %15 = memref.load %arg1[%c21] : memref<31xf32, #tpu.memory_space<smem>>
    %c1 = arith.constant 1 : index
    %16 = memref.load %arg1[%c1] : memref<31xf32, #tpu.memory_space<smem>>
    %17 = vector.broadcast %16 : f32 to vector<16x128xf32>
    %18 = arith.mulf %0, %17 : vector<16x128xf32>
    %c11 = arith.constant 11 : index
    %19 = memref.load %arg1[%c11] : memref<31xf32, #tpu.memory_space<smem>>
    %20 = vector.broadcast %19 : f32 to vector<16x128xf32>
    %21 = arith.addf %18, %20 : vector<16x128xf32>
    %22 = math.tanh %21 : vector<16x128xf32>
    %23 = vector.broadcast %15 : f32 to vector<16x128xf32>
    %24 = arith.mulf %23, %22 : vector<16x128xf32>
    %25 = arith.addf %3, %24 : vector<16x128xf32>
    %c22 = arith.constant 22 : index
    %26 = memref.load %arg1[%c22] : memref<31xf32, #tpu.memory_space<smem>>
    %c2 = arith.constant 2 : index
    %27 = memref.load %arg1[%c2] : memref<31xf32, #tpu.memory_space<smem>>
    %28 = vector.broadcast %27 : f32 to vector<16x128xf32>
    %29 = arith.mulf %0, %28 : vector<16x128xf32>
    %c12 = arith.constant 12 : index
    %30 = memref.load %arg1[%c12] : memref<31xf32, #tpu.memory_space<smem>>
    %31 = vector.broadcast %30 : f32 to vector<16x128xf32>
    %32 = arith.addf %29, %31 : vector<16x128xf32>
    %33 = math.tanh %32 : vector<16x128xf32>
    %34 = vector.broadcast %26 : f32 to vector<16x128xf32>
    %35 = arith.mulf %34, %33 : vector<16x128xf32>
    %36 = arith.addf %14, %35 : vector<16x128xf32>
    %c23 = arith.constant 23 : index
    %37 = memref.load %arg1[%c23] : memref<31xf32, #tpu.memory_space<smem>>
    %c3 = arith.constant 3 : index
    %38 = memref.load %arg1[%c3] : memref<31xf32, #tpu.memory_space<smem>>
    %39 = vector.broadcast %38 : f32 to vector<16x128xf32>
    %40 = arith.mulf %0, %39 : vector<16x128xf32>
    %c13 = arith.constant 13 : index
    %41 = memref.load %arg1[%c13] : memref<31xf32, #tpu.memory_space<smem>>
    %42 = vector.broadcast %41 : f32 to vector<16x128xf32>
    %43 = arith.addf %40, %42 : vector<16x128xf32>
    %44 = math.tanh %43 : vector<16x128xf32>
    %45 = vector.broadcast %37 : f32 to vector<16x128xf32>
    %46 = arith.mulf %45, %44 : vector<16x128xf32>
    %47 = arith.addf %25, %46 : vector<16x128xf32>
    %c24 = arith.constant 24 : index
    %48 = memref.load %arg1[%c24] : memref<31xf32, #tpu.memory_space<smem>>
    %c4 = arith.constant 4 : index
    %49 = memref.load %arg1[%c4] : memref<31xf32, #tpu.memory_space<smem>>
    %50 = vector.broadcast %49 : f32 to vector<16x128xf32>
    %51 = arith.mulf %0, %50 : vector<16x128xf32>
    %c14 = arith.constant 14 : index
    %52 = memref.load %arg1[%c14] : memref<31xf32, #tpu.memory_space<smem>>
    %53 = vector.broadcast %52 : f32 to vector<16x128xf32>
    %54 = arith.addf %51, %53 : vector<16x128xf32>
    %55 = math.tanh %54 : vector<16x128xf32>
    %56 = vector.broadcast %48 : f32 to vector<16x128xf32>
    %57 = arith.mulf %56, %55 : vector<16x128xf32>
    %58 = arith.addf %36, %57 : vector<16x128xf32>
    %c25 = arith.constant 25 : index
    %59 = memref.load %arg1[%c25] : memref<31xf32, #tpu.memory_space<smem>>
    %c5 = arith.constant 5 : index
    %60 = memref.load %arg1[%c5] : memref<31xf32, #tpu.memory_space<smem>>
    %61 = vector.broadcast %60 : f32 to vector<16x128xf32>
    %62 = arith.mulf %0, %61 : vector<16x128xf32>
    %c15 = arith.constant 15 : index
    %63 = memref.load %arg1[%c15] : memref<31xf32, #tpu.memory_space<smem>>
    %64 = vector.broadcast %63 : f32 to vector<16x128xf32>
    %65 = arith.addf %62, %64 : vector<16x128xf32>
    %66 = math.tanh %65 : vector<16x128xf32>
    %67 = vector.broadcast %59 : f32 to vector<16x128xf32>
    %68 = arith.mulf %67, %66 : vector<16x128xf32>
    %69 = arith.addf %47, %68 : vector<16x128xf32>
    %c26 = arith.constant 26 : index
    %70 = memref.load %arg1[%c26] : memref<31xf32, #tpu.memory_space<smem>>
    %c6 = arith.constant 6 : index
    %71 = memref.load %arg1[%c6] : memref<31xf32, #tpu.memory_space<smem>>
    %72 = vector.broadcast %71 : f32 to vector<16x128xf32>
    %73 = arith.mulf %0, %72 : vector<16x128xf32>
    %c16 = arith.constant 16 : index
    %74 = memref.load %arg1[%c16] : memref<31xf32, #tpu.memory_space<smem>>
    %75 = vector.broadcast %74 : f32 to vector<16x128xf32>
    %76 = arith.addf %73, %75 : vector<16x128xf32>
    %77 = math.tanh %76 : vector<16x128xf32>
    %78 = vector.broadcast %70 : f32 to vector<16x128xf32>
    %79 = arith.mulf %78, %77 : vector<16x128xf32>
    %80 = arith.addf %58, %79 : vector<16x128xf32>
    %c27 = arith.constant 27 : index
    %81 = memref.load %arg1[%c27] : memref<31xf32, #tpu.memory_space<smem>>
    %c7 = arith.constant 7 : index
    %82 = memref.load %arg1[%c7] : memref<31xf32, #tpu.memory_space<smem>>
    %83 = vector.broadcast %82 : f32 to vector<16x128xf32>
    %84 = arith.mulf %0, %83 : vector<16x128xf32>
    %c17 = arith.constant 17 : index
    %85 = memref.load %arg1[%c17] : memref<31xf32, #tpu.memory_space<smem>>
    %86 = vector.broadcast %85 : f32 to vector<16x128xf32>
    %87 = arith.addf %84, %86 : vector<16x128xf32>
    %88 = math.tanh %87 : vector<16x128xf32>
    %89 = vector.broadcast %81 : f32 to vector<16x128xf32>
    %90 = arith.mulf %89, %88 : vector<16x128xf32>
    %91 = arith.addf %69, %90 : vector<16x128xf32>
    %c28 = arith.constant 28 : index
    %92 = memref.load %arg1[%c28] : memref<31xf32, #tpu.memory_space<smem>>
    %c8 = arith.constant 8 : index
    %93 = memref.load %arg1[%c8] : memref<31xf32, #tpu.memory_space<smem>>
    %94 = vector.broadcast %93 : f32 to vector<16x128xf32>
    %95 = arith.mulf %0, %94 : vector<16x128xf32>
    %c18 = arith.constant 18 : index
    %96 = memref.load %arg1[%c18] : memref<31xf32, #tpu.memory_space<smem>>
    %97 = vector.broadcast %96 : f32 to vector<16x128xf32>
    %98 = arith.addf %95, %97 : vector<16x128xf32>
    %99 = math.tanh %98 : vector<16x128xf32>
    %100 = vector.broadcast %92 : f32 to vector<16x128xf32>
    %101 = arith.mulf %100, %99 : vector<16x128xf32>
    %102 = arith.addf %80, %101 : vector<16x128xf32>
    %c29 = arith.constant 29 : index
    %103 = memref.load %arg1[%c29] : memref<31xf32, #tpu.memory_space<smem>>
    %c9 = arith.constant 9 : index
    %104 = memref.load %arg1[%c9] : memref<31xf32, #tpu.memory_space<smem>>
    %105 = vector.broadcast %104 : f32 to vector<16x128xf32>
    %106 = arith.mulf %0, %105 : vector<16x128xf32>
    %c19 = arith.constant 19 : index
    %107 = memref.load %arg1[%c19] : memref<31xf32, #tpu.memory_space<smem>>
    %108 = vector.broadcast %107 : f32 to vector<16x128xf32>
    %109 = arith.addf %106, %108 : vector<16x128xf32>
    %110 = math.tanh %109 : vector<16x128xf32>
    %111 = vector.broadcast %103 : f32 to vector<16x128xf32>
    %112 = arith.mulf %111, %110 : vector<16x128xf32>
    %113 = arith.addf %91, %112 : vector<16x128xf32>
    %114 = arith.addf %102, %113 : vector<16x128xf32>
    %c0_2 = arith.constant 0 : index
    %c0_3 = arith.constant 0 : index
    %115 = vector.load %arg3[%c0_2, %c0_3] : memref<16x128xf32, #tpu.memory_space<vmem>>, vector<16x128xf32>
    tpu.vector_store %arg3[%c0_2, %c0_3], %114 {strides = array<i32>} : memref<16x128xf32, #tpu.memory_space<vmem>>, vector<16x128xf32>,
    return
  }
  func.func @transform_0(%arg0: i32) -> i32 {
    %c0_i32 = arith.constant 0 : i32
    %c0_i32_0 = arith.constant 0 : i32
    return %c0_i32 : i32
  }
  func.func @transform_1(%arg0: i32) -> (i32, i32) {
    %c0_i32 = arith.constant 0 : i32
    %c0_i32_0 = arith.constant 0 : i32
    return %arg0, %c0_i32 : i32, i32
  }
  func.func @transform_2(%arg0: i32) -> (i32, i32) {
    %c0_i32 = arith.constant 0 : i32
    %c0_i32_0 = arith.constant 0 : i32
    return %arg0, %c0_i32 : i32, i32
  }
}

</mosaic_0001>

<llo_original>
// kernel: tpu_custom_call.1
$region0: #{tpu_custom_call.1}
  #allocation0 [shape = 'u32[]', space=smem, size = 0x4, offset = 0x4, fixed_abs, tag = 'smem constant byte address 0x4 - core index']
  #allocation1 [shape = 'u32[144,128]{1,0:T(1,128)}', space=vmem, size = 0x12000, scoped, tag = 'internal scratch']
  %s0 = inlined_call_operand.hbm [shape: f32[31], index: 0, kind: input, shape index: {}]
  %s1 = inlined_call_operand.hbm [shape: f32[32,128], index: 1, kind: input, shape index: {}]
  %s2 = inlined_call_operand.hbm [shape: f32[32,128], index: 2, kind: output, shape index: {}]
  %s3 = sld [smem:[#allocation0]]
  $region49: #{tpu_custom_call.1} parent=0
    _
  %s5 = ssub.s32 1, %s3
  %s6 = scalar_select 0, %s5, %s3
  $region1: #{tpu_custom_call.1} parent=0
    #allocation2 [shape = 'u8[512]{0}', space=smem, size = 0x200, scoped, tag = 'input window, operand 0, single buffered']
    #allocation3 [shape = 's32[2]{0}', space=sflag, size = 0x8, scoped, tag = 'scoped memory for tpu_custom_call.1']
    #allocation4 [shape = 's32[2]{0}', space=sflag, size = 0x8, scoped, tag = 'scoped memory for tpu_custom_call.1']
    #allocation5 [shape = 's32[2]{0}', space=sflag, size = 0x8, scoped, tag = 'scoped memory for tpu_custom_call.1']
    #allocation6 [shape = 'u8[16384]{0}', space=vmem, size = 0x4000, scoped, tag = 'input window, operand 1']
    #allocation7 [shape = 'u8[16384]{0}', space=vmem, size = 0x4000, scoped, tag = 'output window, operand 0']
    %7 = vsyncpa [#allocation5], 0
    %8 = vsyncpa [#allocation3], 0
    %s9 = scalar_lea.sflag [#allocation3], 1
    %10 = vsyncpa %s9, 0
    %11 = vsyncpa [#allocation4], 0
    %s12 = scalar_lea.sflag [#allocation4], 1
    %13 = vsyncpa %s12, 0
    loop: start=0, step=1, limit=4
    $region2: #{tpu_custom_call.1} parent=1 // loop_pre_header
      _
    $region3: #{tpu_custom_call.1} parent=1 // loop_header
      %s15 = sphi 0, %s19
      %p16 = scmp.ge.s32.totalorder %s15, 4
      %s23 = sphi 0, %s23
      %s25 = sphi 0, %s23
      %s26 = sphi 0, %s25
      %s40 = sphi 0, %s26
      %s46 = sphi 0, %s48
      %s49 = sphi 0, %s46
      %s50 = sphi 0, %s49
      %s66 = sphi 0, %s50
      %s72 = sphi 0, %s74
      %s75 = sphi 0, %s72
      %s76 = sphi 0, %s75
      %s92 = sphi 0, %s76
    $region4: #{tpu_custom_call.1} parent=1 // loop_header_branch
      %18 = sbr.rel (%p16) target = $region8
    $region5: #{tpu_custom_call.1} parent=1 // loop_body
      %s20 = ssub.s32 %s15, 1
      %s21 = ssub.s32 %s15, 2
      %s22 = sadd.s32 %s15, 1
      %s24 = sadd.s32 %s23, 1
      %p27 = scmp.eq.s32.totalorder %s15, 1
      %p28 = scmp.ne.s32.totalorder %s23, %s25
      %p29 = scmp.eq.s32.totalorder %s15, 0
      %p30 = por %p28, %p29
      %p31 = scmp.ne.s32.totalorder %s23, %s25
      %p32 = scmp.eq.s32.totalorder %s20, 1
      %p33 = por %p31, %p32
      %p34 = scmp.ne.s32.totalorder %s25, %s26
      %p35 = scmp.eq.s32.totalorder %s20, 0
      %p36 = por %p34, %p35
      %p37 = scmp.ne.s32.totalorder %s25, %s26
      %p38 = scmp.eq.s32.totalorder %s21, 1
      %p39 = por %p37, %p38
      %p41 = scmp.ne.s32.totalorder %s26, %s40
      %p42 = scmp.eq.s32.totalorder %s21, 0
      %p43 = por %p41, %p42
      %s44 = ssub.s32 %s15, %s22
      %p45 = scmp.eq.s32.totalorder %s44, 0
      %s47 = sadd.s32 %s46, 1
      %s48 = scalar_select %p45, %s46, %s47
      %p51 = pneg %p45
      %p52 = scmp.eq.s32.totalorder %s15, 1
      %p53 = por %p51, %p52
      %p54 = scmp.ne.s32.totalorder %s46, %s49
      %p55 = scmp.eq.s32.totalorder %s15, 0
      %p56 = por %p54, %p55
      %p57 = scmp.ne.s32.totalorder %s46, %s49
      %p58 = scmp.eq.s32.totalorder %s20, 1
      %p59 = por %p57, %p58
      %p60 = scmp.ne.s32.totalorder %s49, %s50
      %p61 = scmp.eq.s32.totalorder %s20, 0
      %p62 = por %p60, %p61
      %p63 = scmp.ne.s32.totalorder %s49, %s50
      %p64 = scmp.eq.s32.totalorder %s21, 1
      %p65 = por %p63, %p64
      %p67 = scmp.ne.s32.totalorder %s50, %s66
      %p68 = scmp.eq.s32.totalorder %s21, 0
      %p69 = por %p67, %p68
      %s70 = ssub.s32 %s15, %s22
      %p71 = scmp.eq.s32.totalorder %s70, 0
      %s73 = sadd.s32 %s72, 1
      %s74 = scalar_select %p71, %s72, %s73
      %p77 = pneg %p71
      %p78 = scmp.eq.s32.totalorder %s15, 1
      %p79 = por %p77, %p78
      %p80 = scmp.ne.s32.totalorder %s72, %s75
      %p81 = scmp.eq.s32.totalorder %s15, 0
      %p82 = por %p80, %p81
      %p83 = scmp.ne.s32.totalorder %s72, %s75
      %p84 = scmp.eq.s32.totalorder %s20, 1
      %p85 = por %p83, %p84
      %p86 = scmp.ne.s32.totalorder %s75, %s76
      %p87 = scmp.eq.s32.totalorder %s20, 0
      %p88 = por %p86, %p87
      %p89 = scmp.ne.s32.totalorder %s75, %s76
      %p90 = scmp.eq.s32.totalorder %s21, 1
      %p91 = por %p89, %p90
      %p93 = scmp.ne.s32.totalorder %s76, %s92
      %p94 = scmp.eq.s32.totalorder %s21, 0
      %p95 = por %p93, %p94
      %p96 = scmp.le.s32.totalorder 1, %s15
      %p97 = scmp.lt.s32.totalorder %s15, 3
      %p98 = pnand %p96, %p97
      %p99 = pneg %p98
      // Predicated region
      $region9: #{tpu_custom_call.1} parent=5 // pred_check
        _
      $region10: #{tpu_custom_call.1} parent=5 // pred_check_branch
        %101 = sbr.rel (%p98) target = $region12
      $region11: #{tpu_custom_call.1} parent=5 // pred_region
        %s102 = ssub.s32 %s15, 1
        // Predicated region
        $region13: #{tpu_custom_call.1} parent=11 // pred_check
          %p103 = pneg %p36
        $region14: #{tpu_custom_call.1} parent=11 // pred_check_branch
          %105 = sbr.rel (%p103) target = $region16
        $region15: #{tpu_custom_call.1} parent=11 // pred_region
          %s107 = ssub.s32 16, 16
          %108 = vsyncadd [#allocation5], %s107
          %111 = dma.hbm_to_smem %s0, 16, [#allocation2], [#allocation5]
        $region16: #{tpu_custom_call.1} parent=11 // pred_fallthru
          _
      $region12: #{tpu_custom_call.1} parent=5 // pred_fallthru
        _
      %p112 = scmp.lt.s32.totalorder %s15, 2
      // Predicated region
      $region17: #{tpu_custom_call.1} parent=5 // pred_check
        %p113 = pneg %p112
      $region18: #{tpu_custom_call.1} parent=5 // pred_check_branch
        %115 = sbr.rel (%p113) target = $region20
      $region19: #{tpu_custom_call.1} parent=5 // pred_region
        // Predicated region
        $region21: #{tpu_custom_call.1} parent=19 // pred_check
          %p116 = pneg %p56
        $region22: #{tpu_custom_call.1} parent=19 // pred_check_branch
          %118 = sbr.rel (%p116) target = $region24
        $region23: #{tpu_custom_call.1} parent=19 // pred_region
          %s119 = sand.u32 %s46, 1
          %s120 = scalar_lea.sflag [#allocation3], %s119
          %s121 = sand.u32 %s46, 1
          %s122 = smul.addr %s121, 16
          %s123 = scalar_lea.vmem [#allocation6], %s122
          %s124 = smul.u32 2, %s15
          %s126 = ssub.s32 256, 256
          %127 = vsyncadd %s120, %s126
          %s128 = smul.addr %s124, 128
          %s129 = scalar_lea.hbm %s1, %s128
          %s130 = sshll.u32 %s123, 4
          %s131 = int_to_ptr.vmem [resolvable:$true] %s130
          %136 = dma.hbm_to_vmem [thread:$0]  %s129, 256, %s131, %s120, 128, 128, 8
        $region24: #{tpu_custom_call.1} parent=19 // pred_fallthru
          _
      $region20: #{tpu_custom_call.1} parent=5 // pred_fallthru
        _
      %p137 = scmp.le.s32.totalorder 1, %s15
      %p138 = scmp.lt.s32.totalorder %s15, 3
      %p139 = pnand %p137, %p138
      %p140 = pneg %p139
      // Predicated region
      $region25: #{tpu_custom_call.1} parent=5 // pred_check
        _
      $region26: #{tpu_custom_call.1} parent=5 // pred_check_branch
        %142 = sbr.rel (%p139) target = $region28
      $region27: #{tpu_custom_call.1} parent=5 // pred_region
        %s143 = ssub.s32 %s15, 1
        // Predicated region
        $region29: #{tpu_custom_call.1} parent=27 // pred_check
          %p144 = pneg %p36
        $region30: #{tpu_custom_call.1} parent=27 // pred_check_branch
          %146 = sbr.rel (%p144) target = $region32
        $region31: #{tpu_custom_call.1} parent=27 // pred_region
          %147 = dma.done [#allocation5], 16
        $region32: #{tpu_custom_call.1} parent=27 // pred_fallthru
          _
        %s148 = sand.u32 %s49, 1
        %s149 = scalar_lea.sflag [#allocation3], %s148
        %s150 = sand.u32 %s49, 1
        %s151 = smul.addr %s150, 16
        %s152 = scalar_lea.vmem [#allocation6], %s151
        // Predicated region
        $region33: #{tpu_custom_call.1} parent=27 // pred_check
          %p153 = pneg %p62
        $region34: #{tpu_custom_call.1} parent=27 // pred_check_branch
          %155 = sbr.rel (%p153) target = $region36
        $region35: #{tpu_custom_call.1} parent=27 // pred_region
          %156 = dma.done %s149, 256
        $region36: #{tpu_custom_call.1} parent=27 // pred_fallthru
          _
        %157 = sfence
        %p158 = pneg %p36
        %p159 = pneg %p33
        %s160 = sand.u32 %s49, 1
        %s161 = scalar_lea.sflag [#allocation3], %s160
        %s162 = sand.u32 %s49, 1
        %s163 = smul.addr %s162, 16
        %s164 = scalar_lea.vmem [#allocation6], %s163
        %p165 = pneg %p62
        %p166 = pneg %p59
        %p167 = pneg %p88
        %p168 = pneg %p85
        %s169 = sand.u32 %s75, 1
        %s170 = scalar_lea.sflag [#allocation4], %s169
        %s171 = sand.u32 %s75, 1
        %s172 = smul.addr %s171, 16
        %s173 = scalar_lea.vmem [#allocation7], %s172
        %s174 = smul.u32 2, %s20
        %s175 = smul.u32 2, %s20
        %v176 = vld [vmem:[%s152] sm:$0xff]
        %v177 = vld [vmem:[%s152 + $0x8] sm:$0xff]
        %s178 = sld [smem:[#allocation2 + $0x1e]]
        %v179 = vstv %s178
        %s180 = sld [smem:[#allocation2 + $0x14]]
        %s181 = sld [smem:[#allocation2]]
        %v182 = vstv %s181
        %v183 = vmul.f32 %v176, %v182
        %v184 = vmul.f32 %v177, %v182
        %s185 = sld [smem:[#allocation2 + $0xa]]
        %v186 = vstv %s185
        %v187 = vadd.f32 %v183, %v186
        %v188 = vadd.f32 %v184, %v186
        %v189 = vtanh.pop %v187
        %v190 = vtanh.pop %v188
        %v191 = vstv %s180
        %v192 = vmul.f32 %v191, %v189
        %v193 = vmul.f32 %v191, %v190
        %v194 = vadd.f32 %v179, %v192
        %v195 = vadd.f32 %v179, %v193
        %s196 = sld [smem:[#allocation2 + $0x15]]
        %s197 = sld [smem:[#allocation2 + $0x1]]
        %v198 = vstv %s197
        %v199 = vmul.f32 %v176, %v198
        %v200 = vmul.f32 %v177, %v198
        %s201 = sld [smem:[#allocation2 + $0xb]]
        %v202 = vstv %s201
        %v203 = vadd.f32 %v199, %v202
        %v204 = vadd.f32 %v200, %v202
        %v205 = vtanh.pop %v203
        %v206 = vtanh.pop %v204
        %v207 = vstv %s196
        %v208 = vmul.f32 %v207, %v205
        %v209 = vmul.f32 %v207, %v206
        %v210 = vadd.f32 %v208, 0.0
        %v211 = vadd.f32 %v209, 0.0
        %s212 = sld [smem:[#allocation2 + $0x16]]
        %s213 = sld [smem:[#allocation2 + $0x2]]
        %v214 = vstv %s213
        %v215 = vmul.f32 %v176, %v214
        %v216 = vmul.f32 %v177, %v214
        %s217 = sld [smem:[#allocation2 + $0xc]]
        %v218 = vstv %s217
        %v219 = vadd.f32 %v215, %v218
        %v220 = vadd.f32 %v216, %v218
        %v221 = vtanh.pop %v219
        %v222 = vtanh.pop %v220
        %v223 = vstv %s212
        %v224 = vmul.f32 %v223, %v221
        %v225 = vmul.f32 %v223, %v222
        %v226 = vadd.f32 %v194, %v224
        %v227 = vadd.f32 %v195, %v225
        %s228 = sld [smem:[#allocation2 + $0x17]]
        %s229 = sld [smem:[#allocation2 + $0x3]]
        %v230 = vstv %s229
        %v231 = vmul.f32 %v176, %v230
        %v232 = vmul.f32 %v177, %v230
        %s233 = sld [smem:[#allocation2 + $0xd]]
        %v234 = vstv %s233
        %v235 = vadd.f32 %v231, %v234
        %v236 = vadd.f32 %v232, %v234
        %v237 = vtanh.pop %v235
        %v238 = vtanh.pop %v236
        %v239 = vstv %s228
        %v240 = vmul.f32 %v239, %v237
        %v241 = vmul.f32 %v239, %v238
        %v242 = vadd.f32 %v210, %v240
        %v243 = vadd.f32 %v211, %v241
        %s244 = sld [smem:[#allocation2 + $0x18]]
        %s245 = sld [smem:[#allocation2 + $0x4]]
        %v246 = vstv %s245
        %v247 = vmul.f32 %v176, %v246
        %v248 = vmul.f32 %v177, %v246
        %s249 = sld [smem:[#allocation2 + $0xe]]
        %v250 = vstv %s249
        %v251 = vadd.f32 %v247, %v250
        %v252 = vadd.f32 %v248, %v250
        %v253 = vtanh.pop %v251
        %v254 = vtanh.pop %v252
        %v255 = vstv %s244
        %v256 = vmul.f32 %v255, %v253
        %v257 = vmul.f32 %v255, %v254
        %v258 = vadd.f32 %v226, %v256
        %v259 = vadd.f32 %v227, %v257
        %s260 = sld [smem:[#allocation2 + $0x19]]
        %s261 = sld [smem:[#allocation2 + $0x5]]
        %v262 = vstv %s261
        %v263 = vmul.f32 %v176, %v262
        %v264 = vmul.f32 %v177, %v262
        %s265 = sld [smem:[#allocation2 + $0xf]]
        %v266 = vstv %s265
        %v267 = vadd.f32 %v263, %v266
        %v268 = vadd.f32 %v264, %v266
        %v269 = vtanh.pop %v267
        %v270 = vtanh.pop %v268
        %v271 = vstv %s260
        %v272 = vmul.f32 %v271, %v269
        %v273 = vmul.f32 %v271, %v270
        %v274 = vadd.f32 %v242, %v272
        %v275 = vadd.f32 %v243, %v273
        %s276 = sld [smem:[#allocation2 + $0x1a]]
        %s277 = sld [smem:[#allocation2 + $0x6]]
        %v278 = vstv %s277
        %v279 = vmul.f32 %v176, %v278
        %v280 = vmul.f32 %v177, %v278
        %s281 = sld [smem:[#allocation2 + $0x10]]
        %v282 = vstv %s281
        %v283 = vadd.f32 %v279, %v282
        %v284 = vadd.f32 %v280, %v282
        %v285 = vtanh.pop %v283
        %v286 = vtanh.pop %v284
        %v287 = vstv %s276
        %v288 = vmul.f32 %v287, %v285
        %v289 = vmul.f32 %v287, %v286
        %v290 = vadd.f32 %v258, %v288
        %v291 = vadd.f32 %v259, %v289
        %s292 = sld [smem:[#allocation2 + $0x1b]]
        %s293 = sld [smem:[#allocation2 + $0x7]]
        %v294 = vstv %s293
        %v295 = vmul.f32 %v176, %v294
        %v296 = vmul.f32 %v177, %v294
        %s297 = sld [smem:[#allocation2 + $0x11]]
        %v298 = vstv %s297
        %v299 = vadd.f32 %v295, %v298
        %v300 = vadd.f32 %v296, %v298
        %v301 = vtanh.pop %v299
        %v302 = vtanh.pop %v300
        %v303 = vstv %s292
        %v304 = vmul.f32 %v303, %v301
        %v305 = vmul.f32 %v303, %v302
        %v306 = vadd.f32 %v274, %v304
        %v307 = vadd.f32 %v275, %v305
        %s308 = sld [smem:[#allocation2 + $0x1c]]
        %s309 = sld [smem:[#allocation2 + $0x8]]
        %v310 = vstv %s309
        %v311 = vmul.f32 %v176, %v310
        %v312 = vmul.f32 %v177, %v310
        %s313 = sld [smem:[#allocation2 + $0x12]]
        %v314 = vstv %s313
        %v315 = vadd.f32 %v311, %v314
        %v316 = vadd.f32 %v312, %v314
        %v317 = vtanh.pop %v315
        %v318 = vtanh.pop %v316
        %v319 = vstv %s308
        %v320 = vmul.f32 %v319, %v317
        %v321 = vmul.f32 %v319, %v318
        %v322 = vadd.f32 %v290, %v320
        %v323 = vadd.f32 %v291, %v321
        %s324 = sld [smem:[#allocation2 + $0x1d]]
        %s325 = sld [smem:[#allocation2 + $0x9]]
        %v326 = vstv %s325
        %v327 = vmul.f32 %v176, %v326
        %v328 = vmul.f32 %v177, %v326
        %s329 = sld [smem:[#allocation2 + $0x13]]
        %v330 = vstv %s329
        %v331 = vadd.f32 %v327, %v330
        %v332 = vadd.f32 %v328, %v330
        %v333 = vtanh.pop %v331
        %v334 = vtanh.pop %v332
        %v335 = vstv %s324
        %v336 = vmul.f32 %v335, %v333
        %v337 = vmul.f32 %v335, %v334
        %v338 = vadd.f32 %v306, %v336
        %v339 = vadd.f32 %v307, %v337
        %v340 = vadd.f32 %v322, %v338
        %v341 = vadd.f32 %v323, %v339
        %342 = vst [vmem:[%s173] sm:$0xff] %v340
        %343 = vst [vmem:[%s173 + $0x8] sm:$0xff] %v341
        %s344 = sand.u32 %s75, 1
        %s345 = scalar_lea.sflag [#allocation4], %s344
        %s346 = sand.u32 %s75, 1
        %s347 = smul.addr %s346, 16
        %s348 = scalar_lea.vmem [#allocation7], %s347
        // Predicated region
        $region37: #{tpu_custom_call.1} parent=27 // pred_check
          %p349 = pneg %p85
        $region38: #{tpu_custom_call.1} parent=27 // pred_check_branch
          %351 = sbr.rel (%p349) target = $region40
        $region39: #{tpu_custom_call.1} parent=27 // pred_region
          %s352 = smul.u32 2, %s20
          %s354 = ssub.s32 256, 256
          %355 = vsyncadd %s345, %s354
          %s356 = smul.addr %s352, 128
          %s357 = scalar_lea.hbm %s2, %s356
          %s358 = sshll.u32 %s348, 4
          %s359 = int_to_ptr.vmem [resolvable:$true] %s358
          %364 = dma.vmem_to_hbm [thread:$0]  %s359, 256, %s357, %s345, 128, 128, 8
        $region40: #{tpu_custom_call.1} parent=27 // pred_fallthru
          _
      $region28: #{tpu_custom_call.1} parent=5 // pred_fallthru
        _
      %p365 = scmp.le.s32.totalorder 2, %s15
      // Predicated region
      $region41: #{tpu_custom_call.1} parent=5 // pred_check
        %p366 = pneg %p365
      $region42: #{tpu_custom_call.1} parent=5 // pred_check_branch
        %368 = sbr.rel (%p366) target = $region44
      $region43: #{tpu_custom_call.1} parent=5 // pred_region
        %s369 = ssub.s32 %s15, 2
        // Predicated region
        $region45: #{tpu_custom_call.1} parent=43 // pred_check
          %p370 = pneg %p91
        $region46: #{tpu_custom_call.1} parent=43 // pred_check_branch
          %372 = sbr.rel (%p370) target = $region48
        $region47: #{tpu_custom_call.1} parent=43 // pred_region
          %s373 = sand.u32 %s76, 1
          %s374 = scalar_lea.sflag [#allocation4], %s373
          %s375 = sand.u32 %s76, 1
          %s376 = smul.addr %s375, 16
          %s377 = scalar_lea.vmem [#allocation7], %s376
          %378 = dma.done %s374, 256
        $region48: #{tpu_custom_call.1} parent=43 // pred_fallthru
          _
      $region44: #{tpu_custom_call.1} parent=5 // pred_fallthru
        _
    $region6: #{tpu_custom_call.1} parent=1 // loop_footer
      %s19 = sadd.s32 1, %s15
    $region7: #{tpu_custom_call.1} parent=1 // loop_footer_branch
      %14 = sbr.rel target = $region3
    $region8: #{tpu_custom_call.1} parent=1 // loop_exit
      _
    %379 = vsyncpa [#allocation3], 1
    %s380 = scalar_lea.sflag [#allocation3], 1
    %381 = vsyncpa %s380, 1
    %382 = vsyncpa [#allocation4], 1
    %s383 = scalar_lea.sflag [#allocation4], 1
    %384 = vsyncpa %s383, 1
    %385 = vsyncpa [#allocation5], 1
    %s386 = scalar_lea.sflag [#allocation5], 1
    %387 = vsyncpa %s386, 1

</llo_original>
